<compile_context>
chip_gen: v7x
topology: tpu7x:2x2x1
jax: 0.10.0
libtpu: 0.0.40
codegen_flags: <defaults>
</compile_context>

<pallas_src>
import functools

import jax
import jax.numpy as jnp
from jax import lax
from jax.experimental import pallas as pl
from jax.experimental.pallas import tpu as pltpu


def _round_up(x, m):
    return ((x + m - 1) // m) * m


# Contract the trailing (feature) dim of BOTH operands:
#   (K, dim) x (tile, dim) -> (K, tile); samples stay on the lane axis.
_TRANS_B = (((1,), (1,)), ((), ()))


def _weibull_nn_kernel(z_ref,    # (tile, dim) sample tile of Z (native layout)
                       wh_ref,   # (K, dim)    hidden-layer weight
                       bh_ref,   # (K, 1)      hidden-layer bias
                       wab_ref,  # (2, K)      [alpha.weight; beta.weight]
                       bab_ref,  # (2, 1)      [alpha.bias;   beta.bias]
                       e_ref,    # (1, tile)   event indicator
                       t_ref,    # (1, tile)   time
                       lh_ref,   # (1, tile)   out: E * log_hazard
                       ls_ref):  # (1, tile)   out: log_survival
    # Hidden layer: single MXU matmul, samples on lanes (no wrapper transpose).
    h = lax.dot_general(wh_ref[...], z_ref[...], _TRANS_B,
                        preferred_element_type=jnp.float32)           # (K, tile)
    h = jnp.maximum(h + bh_ref[...], 0.0)                             # ReLU

    # Fused alpha/beta heads: (2, K) @ (K, tile) -> (2, tile).
    s = jnp.dot(wab_ref[...], h, preferred_element_type=jnp.float32)
    neg = -(s + bab_ref[...])                                         # (2, tile)
    log_scale = neg[0:1, :]                                           # -alpha(h)
    log_shape = neg[1:2, :]                                           # -beta(h)

    scale = jnp.exp(log_scale)
    log_t = jnp.log(t_ref[...])

    lh_ref[...] = e_ref[...] * (log_shape + log_scale + (scale - 1.0) * log_t)
    ls_ref[...] = -jnp.exp(log_shape + scale * log_t)


@functools.partial(jax.jit, static_argnames=("tile_n",))
def weibull_nn_forward(E, T, Z, Wh, bh, Wa, ba, Wb, bb, *, tile_n=2048):
    """Forward pass of WeibullSurvivalModelNeuralNetwork.

    Returns (E * LogHazard(T, hidden), LogSurvival(T, hidden)), both shape [N].
    tile_n is the per-step sample tile (rounded to a multiple of 128 and
    clamped so the double-buffered (tile, dim) Z block stays inside VMEM).
    """
    N, dim = Z.shape
    K = Wh.shape[0]
    f32 = jnp.float32

    # Sample tile rides the 128-lane axis; keep 2 * (tile, dim) f32 <= ~8 MiB.
    vmem_cap = max(128, (8 * 1024 * 1024 // max(1, 2 * dim * 4)) // 128 * 128)
    tile = max(128, (min(int(tile_n), vmem_cap) // 128) * 128)
    tile = min(tile, _round_up(N, 128))
    grid = (pl.cdiv(N, tile),)

    z = Z.astype(f32)                                                 # (N, dim)
    e = E.reshape(1, N).astype(f32)                                   # (1, N)
    t = T.reshape(1, N).astype(f32)                                   # (1, N)
    wh = Wh.astype(f32)                                               # (K, dim)
    bh2 = bh.reshape(K, 1).astype(f32)                                # (K, 1)
    wab = jnp.concatenate(
        [Wa.reshape(1, K), Wb.reshape(1, K)], axis=0).astype(f32)     # (2, K)
    bab = jnp.concatenate(
        [ba.reshape(1), bb.reshape(1)]).reshape(2, 1).astype(f32)     # (2, 1)

    lh, ls = pl.pallas_call(
        _weibull_nn_kernel,
        out_shape=(jax.ShapeDtypeStruct((1, N), f32),
                   jax.ShapeDtypeStruct((1, N), f32)),
        grid=grid,
        in_specs=[
            pl.BlockSpec((tile, dim), lambda i: (i, 0)),              # Z tile
            pl.BlockSpec((K, dim), lambda i: (0, 0)),                 # Wh
            pl.BlockSpec((K, 1), lambda i: (0, 0)),                   # bh
            pl.BlockSpec((2, K), lambda i: (0, 0)),                   # [Wa; Wb]
            pl.BlockSpec((2, 1), lambda i: (0, 0)),                   # [ba; bb]
            pl.BlockSpec((1, tile), lambda i: (0, i)),                # E
            pl.BlockSpec((1, tile), lambda i: (0, i)),                # T
        ],
        out_specs=(pl.BlockSpec((1, tile), lambda i: (0, i)),         # E*log_hazard
                   pl.BlockSpec((1, tile), lambda i: (0, i))),        # log_surv
        compiler_params=pltpu.CompilerParams(
            dimension_semantics=("parallel",)),
    )(z, wh, bh2, wab, bab, e, t)

    return lh.reshape(N), ls.reshape(N)


def weibull_nn_forward_ref(E, T, Z, Wh, bh, Wa, ba, Wb, bb):
    hp = jax.lax.Precision.HIGHEST
    hidden = jax.nn.relu(jnp.dot(Z, Wh.T, precision=hp) + bh)         # (N, K)
    log_scale = -(jnp.dot(hidden, Wa.T, precision=hp)[:, 0] + ba[0])  # (N,)
    log_shape = -(jnp.dot(hidden, Wb.T, precision=hp)[:, 0] + bb[0])  # (N,)
    scale = jnp.exp(log_scale)
    log_t = jnp.log(T)
    log_hazard = log_shape + log_scale + (scale - 1.0) * log_t
    log_surv = -jnp.exp(log_shape + scale * log_t)
    return E * log_hazard, log_surv


if __name__ == "__main__":
    key = jax.random.PRNGKey(0)
    kz, kt, ke, kw1, kb1, kw2, kw3 = jax.random.split(key, 7)

    # Small shapes; N=250 exercises the masked partial tail block.
    N, dim, K = 250, 32, 16

    Z = jax.random.normal(kz, (N, dim), dtype=jnp.float32)
    T = jax.random.uniform(kt, (N,), dtype=jnp.float32, minval=0.5, maxval=5.0)
    E = (jax.random.uniform(ke, (N,)) > 0.5).astype(jnp.float32)

    Wh = 0.2 * jax.random.normal(kw1, (K, dim), dtype=jnp.float32)    # H.weight
    bh = 0.1 * jax.random.normal(kb1, (K,), dtype=jnp.float32)        # H.bias
    Wa = 0.1 * jax.random.normal(kw2, (1, K), dtype=jnp.float32)      # alpha.weight
    ba = jnp.array([0.05], dtype=jnp.float32)                         # alpha.bias
    Wb = 0.1 * jax.random.normal(kw3, (1, K), dtype=jnp.float32)      # beta.weight
    bb = jnp.array([-0.05], dtype=jnp.float32)                        # beta.bias

    lh_ref, ls_ref = weibull_nn_forward_ref(E, T, Z, Wh, bh, Wa, ba, Wb, bb)

    # Multi-step grid + masked partial last tile (tile=128, grid=(2,)).
    lh, ls = weibull_nn_forward(E, T, Z, Wh, bh, Wa, ba, Wb, bb, tile_n=128)
    jax.block_until_ready((lh, ls))
    assert lh.shape == (N,) and ls.shape == (N,)
    assert jnp.allclose(lh, lh_ref, atol=1e-4, rtol=1e-4), \
        float(jnp.max(jnp.abs(lh - lh_ref)))
    assert jnp.allclose(ls, ls_ref, atol=1e-4, rtol=1e-4), \
        float(jnp.max(jnp.abs(ls - ls_ref)))

    # Default (single big tile) path.
    lh2, ls2 = weibull_nn_forward(E, T, Z, Wh, bh, Wa, ba, Wb, bb)
    jax.block_until_ready((lh2, ls2))
    assert jnp.allclose(lh2, lh_ref, atol=1e-4, rtol=1e-4)
    assert jnp.allclose(ls2, ls_ref, atol=1e-4, rtol=1e-4)

    print("KERNEL_OK")
</pallas_src>

<mosaic_0001>
module attributes {stable_mosaic.version = 11 : i64} {
  func.func @_weibull_nn_kernel(%arg0: i32, %arg1: memref<128x32xf32, #tpu.memory_space<vmem>>, %arg2: memref<16x32xf32, #tpu.memory_space<vmem>>, %arg3: memref<16x1xf32, #tpu.memory_space<vmem>>, %arg4: memref<2x16xf32, #tpu.memory_space<vmem>>, %arg5: memref<2x1xf32, #tpu.memory_space<vmem>>, %arg6: memref<1x128xf32, #tpu.memory_space<vmem>>, %arg7: memref<1x128xf32, #tpu.memory_space<vmem>>, %arg8: memref<1x128xf32, #tpu.memory_space<vmem>>, %arg9: memref<1x128xf32, #tpu.memory_space<vmem>>) attributes {dimension_semantics = [#tpu.dimension_semantics<parallel>], iteration_bounds = array<i64: 2>, scalar_prefetch = 0 : i64, scratch_operands = 0 : i64, tpu.core_type = #tpu.core_type<tc>, window_params = [{transform_indices = @transform_0, window_bounds = array<i64: 128, 32>}, {pipeline_mode = #tpu.pipeline_mode<synchronous>, transform_indices = @transform_1, window_bounds = array<i64: 16, 32>}, {pipeline_mode = #tpu.pipeline_mode<synchronous>, transform_indices = @transform_2, window_bounds = array<i64: 16, 1>}, {pipeline_mode = #tpu.pipeline_mode<synchronous>, transform_indices = @transform_3, window_bounds = array<i64: 2, 16>}, {pipeline_mode = #tpu.pipeline_mode<synchronous>, transform_indices = @transform_4, window_bounds = array<i64: 2, 1>}, {transform_indices = @transform_5, window_bounds = array<i64: 1, 128>}, {transform_indices = @transform_6, window_bounds = array<i64: 1, 128>}, {transform_indices = @transform_7, window_bounds = array<i64: 1, 128>}, {transform_indices = @transform_8, window_bounds = array<i64: 1, 128>}]} {
    %c0 = arith.constant 0 : index
    %c0_0 = arith.constant 0 : index
    %0 = vector.load %arg2[%c0, %c0_0] : memref<16x32xf32, #tpu.memory_space<vmem>>, vector<16x32xf32>
    %c0_1 = arith.constant 0 : index
    %c0_2 = arith.constant 0 : index
    %1 = vector.load %arg1[%c0_1, %c0_2] : memref<128x32xf32, #tpu.memory_space<vmem>>, vector<128x32xf32>
    %cst = arith.constant dense<0.000000e+00> : vector<16x128xf32>
    %2 = tpu.matmul %0, %1, %cst {dimension_numbers = #tpu.dot_dimension_numbers<[1], [1], [0], [0], [0, 0, 1, 0], [], []>} : vector<16x32xf32>, vector<128x32xf32>, vector<16x128xf32> -> vector<16x128xf32>
    %c0_3 = arith.constant 0 : index
    %c0_4 = arith.constant 0 : index
    %3 = vector.load %arg3[%c0_3, %c0_4] : memref<16x1xf32, #tpu.memory_space<vmem>>, vector<16x1xf32>
    %4 = vector.broadcast %3 : vector<16x1xf32> to vector<16x128xf32>
    %5 = arith.addf %2, %4 : vector<16x128xf32>
    %cst_5 = arith.constant 0.000000e+00 : f32
    %6 = vector.broadcast %cst_5 : f32 to vector<16x128xf32>
    %7 = arith.maximumf %5, %6 : vector<16x128xf32>
    %c0_6 = arith.constant 0 : index
    %c0_7 = arith.constant 0 : index
    %8 = vector.load %arg4[%c0_6, %c0_7] : memref<2x16xf32, #tpu.memory_space<vmem>>, vector<2x16xf32>
    %cst_8 = arith.constant dense<0.000000e+00> : vector<2x128xf32>
    %9 = tpu.matmul %8, %7, %cst_8 {dimension_numbers = #tpu.dot_dimension_numbers<[1], [0], [0], [1], [0, 0, 1, 1], [], []>} : vector<2x16xf32>, vector<16x128xf32>, vector<2x128xf32> -> vector<2x128xf32>
    %c0_9 = arith.constant 0 : index
    %c0_10 = arith.constant 0 : index
    %10 = vector.load %arg5[%c0_9, %c0_10] : memref<2x1xf32, #tpu.memory_space<vmem>>, vector<2x1xf32>
    %11 = vector.broadcast %10 : vector<2x1xf32> to vector<2x128xf32>
    %12 = arith.addf %9, %11 : vector<2x128xf32>
    %cst_11 = arith.constant 0.000000e+00 : f32
    %13 = vector.broadcast %cst_11 : f32 to vector<2x128xf32>
    %14 = arith.subf %13, %12 : vector<2x128xf32>
    %15 = vector.extract_strided_slice %14 {offsets = [0, 0], sizes = [1, 128], strides = [1, 1]} : vector<2x128xf32> to vector<1x128xf32>
    %16 = vector.extract_strided_slice %14 {offsets = [1, 0], sizes = [1, 128], strides = [1, 1]} : vector<2x128xf32> to vector<1x128xf32>
    %17 = math.exp %15 : vector<1x128xf32>
    %c0_12 = arith.constant 0 : index
    %c0_13 = arith.constant 0 : index
    %18 = vector.load %arg7[%c0_12, %c0_13] : memref<1x128xf32, #tpu.memory_space<vmem>>, vector<1x128xf32>
    %19 = math.log %18 : vector<1x128xf32>
    %c0_14 = arith.constant 0 : index
    %c0_15 = arith.constant 0 : index
    %20 = vector.load %arg6[%c0_14, %c0_15] : memref<1x128xf32, #tpu.memory_space<vmem>>, vector<1x128xf32>
    %21 = arith.addf %16, %15 : vector<1x128xf32>
    %cst_16 = arith.constant 1.000000e+00 : f32
    %22 = vector.broadcast %cst_16 : f32 to vector<1x128xf32>
    %23 = arith.subf %17, %22 : vector<1x128xf32>
    %24 = arith.mulf %23, %19 : vector<1x128xf32>
    %25 = arith.addf %21, %24 : vector<1x128xf32>
    %26 = arith.mulf %20, %25 : vector<1x128xf32>
    %c0_17 = arith.constant 0 : index
    %c0_18 = arith.constant 0 : index
    %27 = vector.load %arg8[%c0_17, %c0_18] : memref<1x128xf32, #tpu.memory_space<vmem>>, vector<1x128xf32>
    tpu.vector_store %arg8[%c0_17, %c0_18], %26 {strides = array<i32>} : memref<1x128xf32, #tpu.memory_space<vmem>>, vector<1x128xf32>,
    %28 = arith.mulf %17, %19 : vector<1x128xf32>
    %29 = arith.addf %16, %28 : vector<1x128xf32>
    %30 = math.exp %29 : vector<1x128xf32>
    %cst_19 = arith.constant 0.000000e+00 : f32
    %31 = vector.broadcast %cst_19 : f32 to vector<1x128xf32>
    %32 = arith.subf %31, %30 : vector<1x128xf32>
    %c0_20 = arith.constant 0 : index
    %c0_21 = arith.constant 0 : index
    %33 = vector.load %arg9[%c0_20, %c0_21] : memref<1x128xf32, #tpu.memory_space<vmem>>, vector<1x128xf32>
    tpu.vector_store %arg9[%c0_20, %c0_21], %32 {strides = array<i32>} : memref<1x128xf32, #tpu.memory_space<vmem>>, vector<1x128xf32>,
    return
  }
  func.func @transform_0(%arg0: i32) -> (i32, i32) {
    %c0_i32 = arith.constant 0 : i32
    %c0_i32_0 = arith.constant 0 : i32
    return %arg0, %c0_i32 : i32, i32
  }
  func.func @transform_1(%arg0: i32) -> (i32, i32) {
    %c0_i32 = arith.constant 0 : i32
    %c0_i32_0 = arith.constant 0 : i32
    %c0_i32_1 = arith.constant 0 : i32
    return %c0_i32, %c0_i32_0 : i32, i32
  }
  func.func @transform_2(%arg0: i32) -> (i32, i32) {
    %c0_i32 = arith.constant 0 : i32
    %c0_i32_0 = arith.constant 0 : i32
    %c0_i32_1 = arith.constant 0 : i32
    return %c0_i32, %c0_i32_0 : i32, i32
  }
  func.func @transform_3(%arg0: i32) -> (i32, i32) {
    %c0_i32 = arith.constant 0 : i32
    %c0_i32_0 = arith.constant 0 : i32
    %c0_i32_1 = arith.constant 0 : i32
    return %c0_i32, %c0_i32_0 : i32, i32
  }
  func.func @transform_4(%arg0: i32) -> (i32, i32) {
    %c0_i32 = arith.constant 0 : i32
    %c0_i32_0 = arith.constant 0 : i32
    %c0_i32_1 = arith.constant 0 : i32
    return %c0_i32, %c0_i32_0 : i32, i32
  }
  func.func @transform_5(%arg0: i32) -> (i32, i32) {
    %c0_i32 = arith.constant 0 : i32
    %c0_i32_0 = arith.constant 0 : i32
    return %c0_i32, %arg0 : i32, i32
  }
  func.func @transform_6(%arg0: i32) -> (i32, i32) {
    %c0_i32 = arith.constant 0 : i32
    %c0_i32_0 = arith.constant 0 : i32
    return %c0_i32, %arg0 : i32, i32
  }
  func.func @transform_7(%arg0: i32) -> (i32, i32) {
    %c0_i32 = arith.constant 0 : i32
    %c0_i32_0 = arith.constant 0 : i32
    return %c0_i32, %arg0 : i32, i32
  }
  func.func @transform_8(%arg0: i32) -> (i32, i32) {
    %c0_i32 = arith.constant 0 : i32
    %c0_i32_0 = arith.constant 0 : i32
    return %c0_i32, %arg0 : i32, i32
  }
}

</mosaic_0001>

<llo_original>
// kernel: weibull_nn_forward.1
$region0: #{weibull_nn_forward.1}
  #allocation0 [shape = 'u32[]', space=smem, size = 0x4, offset = 0x4, fixed_abs, tag = 'smem constant byte address 0x4 - core index']
  #allocation1 [shape = 'u32[144,128]{1,0:T(1,128)}', space=vmem, size = 0x12000, scoped, tag = 'internal scratch']
  %s0 = inlined_call_operand.vmem [shape: f32[250,32], index: 0, kind: input, shape index: {}]
  %s1 = inlined_call_operand.vmem [shape: f32[16,32], index: 1, kind: input, shape index: {}]
  %s2 = inlined_call_operand.vmem [shape: f32[16,1], index: 2, kind: input, shape index: {}]
  %s3 = inlined_call_operand.vmem [shape: f32[2,16], index: 3, kind: input, shape index: {}]
  %s4 = inlined_call_operand.vmem [shape: f32[2,1], index: 4, kind: input, shape index: {}]
  %s5 = inlined_call_operand.vmem [shape: f32[1,250], index: 5, kind: input, shape index: {}]
  %s6 = inlined_call_operand.vmem [shape: f32[1,250], index: 6, kind: input, shape index: {}]
  %s7 = inlined_call_operand.hbm [shape: f32[1,250], index: 7, kind: output, shape index: {0}]
  %s8 = inlined_call_operand.hbm [shape: f32[1,250], index: 8, kind: output, shape index: {1}]
  %9 = xla_tuple %s7, %s8
  %s10 = sld [smem:[#allocation0]]
  $region69: #{weibull_nn_forward.1} parent=0
    _
  %s12 = ssub.s32 1, %s10
  %s13 = scalar_select 0, %s12, %s10
  $region1: #{weibull_nn_forward.1} parent=0
    #allocation2 [shape = 'u8[1024]{0}', space=vmem, size = 0x400, scoped, tag = 'output window, operand 0']
    #allocation3 [shape = 's32[2]{0}', space=sflag, size = 0x8, scoped, tag = 'scoped memory for weibull_nn_forward.1']
    #allocation4 [shape = 'u8[1024]{0}', space=vmem, size = 0x400, scoped, tag = 'output window, operand 1']
    #allocation5 [shape = 's32[2]{0}', space=sflag, size = 0x8, scoped, tag = 'scoped memory for weibull_nn_forward.1']
    %14 = vsyncpa [#allocation3], 0
    %s15 = scalar_lea.sflag [#allocation3], 1
    %16 = vsyncpa %s15, 0
    %17 = vsyncpa [#allocation5], 0
    %s18 = scalar_lea.sflag [#allocation5], 1
    %19 = vsyncpa %s18, 0
    loop: start=0, step=1, limit=4
    $region2: #{weibull_nn_forward.1} parent=1 // loop_pre_header
      _
    $region3: #{weibull_nn_forward.1} parent=1 // loop_header
      %s21 = sphi 0, %s25
      %p22 = scmp.ge.s32.totalorder %s21, 4
      %s31 = sphi 0, %s33
      %s34 = sphi 0, %s31
      %s35 = sphi 0, %s34
      %s51 = sphi 0, %s35
      %s55 = sphi 0, %s55
      %s57 = sphi 0, %s55
      %s58 = sphi 0, %s57
      %s72 = sphi 0, %s58
      %s76 = sphi 0, %s76
      %s78 = sphi 0, %s76
      %s79 = sphi 0, %s78
      %s93 = sphi 0, %s79
      %s97 = sphi 0, %s97
      %s99 = sphi 0, %s97
      %s100 = sphi 0, %s99
      %s114 = sphi 0, %s100
      %s118 = sphi 0, %s118
      %s120 = sphi 0, %s118
      %s121 = sphi 0, %s120
      %s135 = sphi 0, %s121
      %s141 = sphi 0, %s143
      %s144 = sphi 0, %s141
      %s145 = sphi 0, %s144
      %s161 = sphi 0, %s145
      %s167 = sphi 0, %s169
      %s170 = sphi 0, %s167
      %s171 = sphi 0, %s170
      %s187 = sphi 0, %s171
      %s193 = sphi 0, %s195
      %s196 = sphi 0, %s193
      %s197 = sphi 0, %s196
      %s213 = sphi 0, %s197
      %s219 = sphi 0, %s221
      %s222 = sphi 0, %s219
      %s223 = sphi 0, %s222
      %s239 = sphi 0, %s223
    $region4: #{weibull_nn_forward.1} parent=1 // loop_header_branch
      %24 = sbr.rel (%p22) target = $region8
    $region5: #{weibull_nn_forward.1} parent=1 // loop_body
      %s26 = ssub.s32 %s21, 1
      %s27 = ssub.s32 %s21, 2
      %s28 = sadd.s32 %s21, 1
      %s29 = ssub.s32 %s21, %s28
      %p30 = scmp.eq.s32.totalorder %s29, 0
      %s32 = sadd.s32 %s31, 1
      %s33 = scalar_select %p30, %s31, %s32
      %p36 = pneg %p30
      %p37 = scmp.eq.s32.totalorder %s21, 1
      %p38 = por %p36, %p37
      %p39 = scmp.ne.s32.totalorder %s31, %s34
      %p40 = scmp.eq.s32.totalorder %s21, 0
      %p41 = por %p39, %p40
      %p42 = scmp.ne.s32.totalorder %s31, %s34
      %p43 = scmp.eq.s32.totalorder %s26, 1
      %p44 = por %p42, %p43
      %p45 = scmp.ne.s32.totalorder %s34, %s35
      %p46 = scmp.eq.s32.totalorder %s26, 0
      %p47 = por %p45, %p46
      %p48 = scmp.ne.s32.totalorder %s34, %s35
      %p49 = scmp.eq.s32.totalorder %s27, 1
      %p50 = por %p48, %p49
      %p52 = scmp.ne.s32.totalorder %s35, %s51
      %p53 = scmp.eq.s32.totalorder %s27, 0
      %p54 = por %p52, %p53
      %s56 = sadd.s32 %s55, 1
      %p59 = scmp.eq.s32.totalorder %s21, 1
      %p60 = scmp.ne.s32.totalorder %s55, %s57
      %p61 = scmp.eq.s32.totalorder %s21, 0
      %p62 = por %p60, %p61
      %p63 = scmp.ne.s32.totalorder %s55, %s57
      %p64 = scmp.eq.s32.totalorder %s26, 1
      %p65 = por %p63, %p64
      %p66 = scmp.ne.s32.totalorder %s57, %s58
      %p67 = scmp.eq.s32.totalorder %s26, 0
      %p68 = por %p66, %p67
      %p69 = scmp.ne.s32.totalorder %s57, %s58
      %p70 = scmp.eq.s32.totalorder %s27, 1
      %p71 = por %p69, %p70
      %p73 = scmp.ne.s32.totalorder %s58, %s72
      %p74 = scmp.eq.s32.totalorder %s27, 0
      %p75 = por %p73, %p74
      %s77 = sadd.s32 %s76, 1
      %p80 = scmp.eq.s32.totalorder %s21, 1
      %p81 = scmp.ne.s32.totalorder %s76, %s78
      %p82 = scmp.eq.s32.totalorder %s21, 0
      %p83 = por %p81, %p82
      %p84 = scmp.ne.s32.totalorder %s76, %s78
      %p85 = scmp.eq.s32.totalorder %s26, 1
      %p86 = por %p84, %p85
      %p87 = scmp.ne.s32.totalorder %s78, %s79
      %p88 = scmp.eq.s32.totalorder %s26, 0
      %p89 = por %p87, %p88
      %p90 = scmp.ne.s32.totalorder %s78, %s79
      %p91 = scmp.eq.s32.totalorder %s27, 1
      %p92 = por %p90, %p91
      %p94 = scmp.ne.s32.totalorder %s79, %s93
      %p95 = scmp.eq.s32.totalorder %s27, 0
      %p96 = por %p94, %p95
      %s98 = sadd.s32 %s97, 1
      %p101 = scmp.eq.s32.totalorder %s21, 1
      %p102 = scmp.ne.s32.totalorder %s97, %s99
      %p103 = scmp.eq.s32.totalorder %s21, 0
      %p104 = por %p102, %p103
      %p105 = scmp.ne.s32.totalorder %s97, %s99
      %p106 = scmp.eq.s32.totalorder %s26, 1
      %p107 = por %p105, %p106
      %p108 = scmp.ne.s32.totalorder %s99, %s100
      %p109 = scmp.eq.s32.totalorder %s26, 0
      %p110 = por %p108, %p109
      %p111 = scmp.ne.s32.totalorder %s99, %s100
      %p112 = scmp.eq.s32.totalorder %s27, 1
      %p113 = por %p111, %p112
      %p115 = scmp.ne.s32.totalorder %s100, %s114
      %p116 = scmp.eq.s32.totalorder %s27, 0
      %p117 = por %p115, %p116
      %s119 = sadd.s32 %s118, 1
      %p122 = scmp.eq.s32.totalorder %s21, 1
      %p123 = scmp.ne.s32.totalorder %s118, %s120
      %p124 = scmp.eq.s32.totalorder %s21, 0
      %p125 = por %p123, %p124
      %p126 = scmp.ne.s32.totalorder %s118, %s120
      %p127 = scmp.eq.s32.totalorder %s26, 1
      %p128 = por %p126, %p127
      %p129 = scmp.ne.s32.totalorder %s120, %s121
      %p130 = scmp.eq.s32.totalorder %s26, 0
      %p131 = por %p129, %p130
      %p132 = scmp.ne.s32.totalorder %s120, %s121
      %p133 = scmp.eq.s32.totalorder %s27, 1
      %p134 = por %p132, %p133
      %p136 = scmp.ne.s32.totalorder %s121, %s135
      %p137 = scmp.eq.s32.totalorder %s27, 0
      %p138 = por %p136, %p137
      %s139 = ssub.s32 %s21, %s28
      %p140 = scmp.eq.s32.totalorder %s139, 0
      %s142 = sadd.s32 %s141, 1
      %s143 = scalar_select %p140, %s141, %s142
      %p146 = pneg %p140
      %p147 = scmp.eq.s32.totalorder %s21, 1
      %p148 = por %p146, %p147
      %p149 = scmp.ne.s32.totalorder %s141, %s144
      %p150 = scmp.eq.s32.totalorder %s21, 0
      %p151 = por %p149, %p150
      %p152 = scmp.ne.s32.totalorder %s141, %s144
      %p153 = scmp.eq.s32.totalorder %s26, 1
      %p154 = por %p152, %p153
      %p155 = scmp.ne.s32.totalorder %s144, %s145
      %p156 = scmp.eq.s32.totalorder %s26, 0
      %p157 = por %p155, %p156
      %p158 = scmp.ne.s32.totalorder %s144, %s145
      %p159 = scmp.eq.s32.totalorder %s27, 1
      %p160 = por %p158, %p159
      %p162 = scmp.ne.s32.totalorder %s145, %s161
      %p163 = scmp.eq.s32.totalorder %s27, 0
      %p164 = por %p162, %p163
      %s165 = ssub.s32 %s21, %s28
      %p166 = scmp.eq.s32.totalorder %s165, 0
      %s168 = sadd.s32 %s167, 1
      %s169 = scalar_select %p166, %s167, %s168
      %p172 = pneg %p166
      %p173 = scmp.eq.s32.totalorder %s21, 1
      %p174 = por %p172, %p173
      %p175 = scmp.ne.s32.totalorder %s167, %s170
      %p176 = scmp.eq.s32.totalorder %s21, 0
      %p177 = por %p175, %p176
      %p178 = scmp.ne.s32.totalorder %s167, %s170
      %p179 = scmp.eq.s32.totalorder %s26, 1
      %p180 = por %p178, %p179
      %p181 = scmp.ne.s32.totalorder %s170, %s171
      %p182 = scmp.eq.s32.totalorder %s26, 0
      %p183 = por %p181, %p182
      %p184 = scmp.ne.s32.totalorder %s170, %s171
      %p185 = scmp.eq.s32.totalorder %s27, 1
      %p186 = por %p184, %p185
      %p188 = scmp.ne.s32.totalorder %s171, %s187
      %p189 = scmp.eq.s32.totalorder %s27, 0
      %p190 = por %p188, %p189
      %s191 = ssub.s32 %s21, %s28
      %p192 = scmp.eq.s32.totalorder %s191, 0
      %s194 = sadd.s32 %s193, 1
      %s195 = scalar_select %p192, %s193, %s194
      %p198 = pneg %p192
      %p199 = scmp.eq.s32.totalorder %s21, 1
      %p200 = por %p198, %p199
      %p201 = scmp.ne.s32.totalorder %s193, %s196
      %p202 = scmp.eq.s32.totalorder %s21, 0
      %p203 = por %p201, %p202
      %p204 = scmp.ne.s32.totalorder %s193, %s196
      %p205 = scmp.eq.s32.totalorder %s26, 1
      %p206 = por %p204, %p205
      %p207 = scmp.ne.s32.totalorder %s196, %s197
      %p208 = scmp.eq.s32.totalorder %s26, 0
      %p209 = por %p207, %p208
      %p210 = scmp.ne.s32.totalorder %s196, %s197
      %p211 = scmp.eq.s32.totalorder %s27, 1
      %p212 = por %p210, %p211
      %p214 = scmp.ne.s32.totalorder %s197, %s213
      %p215 = scmp.eq.s32.totalorder %s27, 0
      %p216 = por %p214, %p215
      %s217 = ssub.s32 %s21, %s28
      %p218 = scmp.eq.s32.totalorder %s217, 0
      %s220 = sadd.s32 %s219, 1
      %s221 = scalar_select %p218, %s219, %s220
      %p224 = pneg %p218
      %p225 = scmp.eq.s32.totalorder %s21, 1
      %p226 = por %p224, %p225
      %p227 = scmp.ne.s32.totalorder %s219, %s222
      %p228 = scmp.eq.s32.totalorder %s21, 0
      %p229 = por %p227, %p228
      %p230 = scmp.ne.s32.totalorder %s219, %s222
      %p231 = scmp.eq.s32.totalorder %s26, 1
      %p232 = por %p230, %p231
      %p233 = scmp.ne.s32.totalorder %s222, %s223
      %p234 = scmp.eq.s32.totalorder %s26, 0
      %p235 = por %p233, %p234
      %p236 = scmp.ne.s32.totalorder %s222, %s223
      %p237 = scmp.eq.s32.totalorder %s27, 1
      %p238 = por %p236, %p237
      %p240 = scmp.ne.s32.totalorder %s223, %s239
      %p241 = scmp.eq.s32.totalorder %s27, 0
      %p242 = por %p240, %p241
      %p243 = scmp.le.s32.totalorder 1, %s21
      %p244 = scmp.lt.s32.totalorder %s21, 3
      %p245 = pnand %p243, %p244
      %p246 = pneg %p245
      // Predicated region
      $region9: #{weibull_nn_forward.1} parent=5 // pred_check
        _
      $region10: #{weibull_nn_forward.1} parent=5 // pred_check_branch
        %248 = sbr.rel (%p245) target = $region12
      $region11: #{weibull_nn_forward.1} parent=5 // pred_region
        %s249 = ssub.s32 %s21, 1
        // Predicated region
        $region13: #{weibull_nn_forward.1} parent=11 // pred_check
          %p250 = pneg %p68
        $region14: #{weibull_nn_forward.1} parent=11 // pred_check_branch
          %252 = sbr.rel (%p250) target = $region16
        $region15: #{weibull_nn_forward.1} parent=11 // pred_region
          _
        $region16: #{weibull_nn_forward.1} parent=11 // pred_fallthru
          _
        // Predicated region
        $region17: #{weibull_nn_forward.1} parent=11 // pred_check
          %p253 = pneg %p89
        $region18: #{weibull_nn_forward.1} parent=11 // pred_check_branch
          %255 = sbr.rel (%p253) target = $region20
        $region19: #{weibull_nn_forward.1} parent=11 // pred_region
          _
        $region20: #{weibull_nn_forward.1} parent=11 // pred_fallthru
          _
        // Predicated region
        $region21: #{weibull_nn_forward.1} parent=11 // pred_check
          %p256 = pneg %p110
        $region22: #{weibull_nn_forward.1} parent=11 // pred_check_branch
          %258 = sbr.rel (%p256) target = $region24
        $region23: #{weibull_nn_forward.1} parent=11 // pred_region
          _
        $region24: #{weibull_nn_forward.1} parent=11 // pred_fallthru
          _
        // Predicated region
        $region25: #{weibull_nn_forward.1} parent=11 // pred_check
          %p259 = pneg %p131
        $region26: #{weibull_nn_forward.1} parent=11 // pred_check_branch
          %261 = sbr.rel (%p259) target = $region28
        $region27: #{weibull_nn_forward.1} parent=11 // pred_region
          _
        $region28: #{weibull_nn_forward.1} parent=11 // pred_fallthru
          _
      $region12: #{weibull_nn_forward.1} parent=5 // pred_fallthru
        _
      %p262 = scmp.lt.s32.totalorder %s21, 2
      // Predicated region
      $region29: #{weibull_nn_forward.1} parent=5 // pred_check
        %p263 = pneg %p262
      $region30: #{weibull_nn_forward.1} parent=5 // pred_check_branch
        %265 = sbr.rel (%p263) target = $region32
      $region31: #{weibull_nn_forward.1} parent=5 // pred_region
        // Predicated region
        $region33: #{weibull_nn_forward.1} parent=31 // pred_check
          %p266 = pneg %p41
        $region34: #{weibull_nn_forward.1} parent=31 // pred_check_branch
          %268 = sbr.rel (%p266) target = $region36
        $region35: #{weibull_nn_forward.1} parent=31 // pred_region
          %s269 = smul.u32 16, %s21
          %p270 = scmp.lt.s32.totalorder %s269, 31
          %s271 = scalar_select %p270, %s269, 31
          %s272 = smul.addr %s271, 8
          %s273 = scalar_lea.vmem %s0, %s272
          %s274 = smul.u32 16, %s21
        $region36: #{weibull_nn_forward.1} parent=31 // pred_fallthru
          _
        // Predicated region
        $region37: #{weibull_nn_forward.1} parent=31 // pred_check
          %p275 = pneg %p151
        $region38: #{weibull_nn_forward.1} parent=31 // pred_check_branch
          %277 = sbr.rel (%p275) target = $region40
        $region39: #{weibull_nn_forward.1} parent=31 // pred_region
          %p278 = scmp.lt.s32.totalorder %s21, 1
          %s279 = scalar_select %p278, %s21, 1
          %s280 = scalar_lea.vmem %s5, %s279
        $region40: #{weibull_nn_forward.1} parent=31 // pred_fallthru
          _
        // Predicated region
        $region41: #{weibull_nn_forward.1} parent=31 // pred_check
          %p281 = pneg %p177
        $region42: #{weibull_nn_forward.1} parent=31 // pred_check_branch
          %283 = sbr.rel (%p281) target = $region44
        $region43: #{weibull_nn_forward.1} parent=31 // pred_region
          %p284 = scmp.lt.s32.totalorder %s21, 1
          %s285 = scalar_select %p284, %s21, 1
          %s286 = scalar_lea.vmem %s6, %s285
        $region44: #{weibull_nn_forward.1} parent=31 // pred_fallthru
          _
      $region32: #{weibull_nn_forward.1} parent=5 // pred_fallthru
        _
      %p287 = scmp.le.s32.totalorder 1, %s21
      %p288 = scmp.lt.s32.totalorder %s21, 3
      %p289 = pnand %p287, %p288
      %p290 = pneg %p289
      // Predicated region
      $region45: #{weibull_nn_forward.1} parent=5 // pred_check
        _
      $region46: #{weibull_nn_forward.1} parent=5 // pred_check_branch
        %292 = sbr.rel (%p289) target = $region48
      $region47: #{weibull_nn_forward.1} parent=5 // pred_region
        %s293 = ssub.s32 %s21, 1
        %s294 = smul.u32 16, %s26
        %p295 = scmp.lt.s32.totalorder %s294, 31
        %s296 = scalar_select %p295, %s294, 31
        %s297 = smul.addr %s296, 8
        %s298 = scalar_lea.vmem %s0, %s297
        %p299 = pneg %p47
        %p300 = pneg %p44
        %p301 = pneg %p68
        %p302 = pneg %p65
        %p303 = pneg %p89
        %p304 = pneg %p86
        %p305 = pneg %p110
        %p306 = pneg %p107
        %p307 = pneg %p131
        %p308 = pneg %p128
        %p309 = scmp.lt.s32.totalorder %s26, 1
        %s310 = scalar_select %p309, %s26, 1
        %s311 = scalar_lea.vmem %s5, %s310
        %p312 = pneg %p157
        %p313 = pneg %p154
        %p314 = scmp.lt.s32.totalorder %s26, 1
        %s315 = scalar_select %p314, %s26, 1
        %s316 = scalar_lea.vmem %s6, %s315
        %p317 = pneg %p183
        %p318 = pneg %p180
        %p319 = pneg %p209
        %p320 = pneg %p206
        %s321 = sand.u32 %s196, 1
        %s322 = scalar_lea.sflag [#allocation3], %s321
        %s323 = sand.u32 %s196, 1
        %s324 = scalar_lea.vmem [#allocation2], %s323
        %p325 = pneg %p235
        %p326 = pneg %p232
        %s327 = sand.u32 %s222, 1
        %s328 = scalar_lea.sflag [#allocation5], %s327
        %s329 = sand.u32 %s222, 1
        %s330 = scalar_lea.vmem [#allocation4], %s329
        %s331 = smul.u32 16, %s26
        %p332 = scmp.lt.s32.totalorder %s331, 31
        %s333 = scalar_select %p332, %s331, 31
        %s334 = smul.addr %s333, 8
        %s335 = scalar_lea.vmem %s0, %s334
        %s336 = smul.u32 16, %s26
        %p337 = scmp.lt.s32.totalorder %s26, 1
        %s338 = scalar_select %p337, %s26, 1
        %s339 = scalar_lea.vmem %s5, %s338
        %p340 = scmp.lt.s32.totalorder %s26, 1
        %s341 = scalar_select %p340, %s26, 1
        %s342 = scalar_lea.vmem %s6, %s341
        %v343 = vld [vmem:[%s1] sm:$0xff]
        %v344 = vld [vmem:[%s1 + $0x8] sm:$0xff]
        %v345 = vld [vmem:[%s335] sm:$0xff]
        %v346 = vld [vmem:[%s335 + $0x8] sm:$0xff]
        %v347 = vld [vmem:[%s335 + $0x10] sm:$0xff]
        %v348 = vld [vmem:[%s335 + $0x18] sm:$0xff]
        %v349 = vld [vmem:[%s335 + $0x20] sm:$0xff]
        %v350 = vld [vmem:[%s335 + $0x28] sm:$0xff]
        %v351 = vld [vmem:[%s335 + $0x30] sm:$0xff]
        %v352 = vld [vmem:[%s335 + $0x38] sm:$0xff]
        %v353 = vld [vmem:[%s335 + $0x40] sm:$0xff]
        %v354 = vld [vmem:[%s335 + $0x48] sm:$0xff]
        %v355 = vld [vmem:[%s335 + $0x50] sm:$0xff]
        %v356 = vld [vmem:[%s335 + $0x58] sm:$0xff]
        %v357 = vld [vmem:[%s335 + $0x60] sm:$0xff]
        %v358 = vld [vmem:[%s335 + $0x68] sm:$0xff]
        %v359 = vld [vmem:[%s335 + $0x70] sm:$0xff]
        %v360 = vld [vmem:[%s335 + $0x78] sm:$0xff]
        %v361 = vld [vmem:[%s2] sm:$0xff]
        %v362 = vld [vmem:[%s2 + $0x8] sm:$0xff]
        %364 = vset.pattern.permute.xlu0 0
        %365 = vperm.xlu0 %364, %v361
        %v366 = vpop.permute.xlu0 %365
        %369 = vset.pattern.permute.xlu0 0
        %370 = vperm.xlu0 %369, %v362
        %v371 = vpop.permute.xlu0 %370
        %vm373 = vcmask 261120
        %v375 = vsel %vm373, %v343, 0
        %v378 = vsel %vm373, %v344, 0
        %v381 = vsel %vm373, %v345, 0
        %v384 = vsel %vm373, %v346, 0
        %v387 = vsel %vm373, %v347, 0
        %v390 = vsel %vm373, %v348, 0
        %v393 = vsel %vm373, %v349, 0
        %v396 = vsel %vm373, %v350, 0
        %v399 = vsel %vm373, %v351, 0
        %v402 = vsel %vm373, %v352, 0
        %v405 = vsel %vm373, %v353, 0
        %v408 = vsel %vm373, %v354, 0
        %v411 = vsel %vm373, %v355, 0
        %v414 = vsel %vm373, %v356, 0
        %v417 = vsel %vm373, %v357, 0
        %v420 = vsel %vm373, %v358, 0
        %v423 = vsel %vm373, %v359, 0
        %v426 = vsel %vm373, %v360, 0
        %428 = vmatprep.subr.mxu0 0.0
        %429 = vmatpush1.xpose.msra.mxu0 %v381
        %430 = vmatprep.subr.mxu0 0.0
        %431 = vmatpush1.xpose.msra.mxu0 %v384
        %432 = vmatprep.subr.mxu0 0.0
        %433 = vmatpush1.xpose.msra.mxu0 %v387
        %434 = vmatprep.subr.mxu0 0.0
        %435 = vmatpush1.xpose.msra.mxu0 %v390
        %436 = vmatprep.subr.mxu0 0.0
        %437 = vmatpush1.xpose.msra.mxu0 %v393
        %438 = vmatprep.subr.mxu0 0.0
        %439 = vmatpush1.xpose.msra.mxu0 %v396
        %440 = vmatprep.subr.mxu0 0.0
        %441 = vmatpush1.xpose.msra.mxu0 %v399
        %442 = vmatprep.subr.mxu0 0.0
        %443 = vmatpush1.xpose.msra.mxu0 %v402
        %444 = vmatprep.subr.mxu0 0.0
        %445 = vmatpush1.xpose.msra.mxu0 %v405
        %446 = vmatprep.subr.mxu0 0.0
        %447 = vmatpush1.xpose.msra.mxu0 %v408
        %448 = vmatprep.subr.mxu0 0.0
        %449 = vmatpush1.xpose.msra.mxu0 %v411
        %450 = vmatprep.subr.mxu0 0.0
        %451 = vmatpush1.xpose.msra.mxu0 %v414
        %452 = vmatprep.subr.mxu0 0.0
        %453 = vmatpush1.xpose.msra.mxu0 %v417
        %454 = vmatprep.subr.mxu0 0.0
        %455 = vmatpush1.xpose.msra.mxu0 %v420
        %456 = vmatprep.subr.mxu0 0.0
        %457 = vmatpush1.xpose.msra.mxu0 %v423
        %458 = vmatprep.subr.mxu0 0.0
        %459 = vmatpush1.xpose.msra.mxu0 %v426
        %460 = vmatprep.subr.mxu0 0.0
        %461 = vmatpush1.xpose.msra.mxu0 0.0
        %462 = vmatprep.subr.mxu0 0.0
        %463 = vmatpush1.xpose.msra.mxu0 0.0
        %464 = vmatprep.subr.mxu0 0.0
        %465 = vmatpush1.xpose.msra.mxu0 0.0
        %466 = vmatprep.subr.mxu0 0.0
        %467 = vmatpush1.xpose.msra.mxu0 0.0
        %468 = vmatprep.subr.mxu0 0.0
        %469 = vmatpush1.xpose.msra.mxu0 0.0
        %470 = vmatprep.subr.mxu0 0.0
        %471 = vmatpush1.xpose.msra.mxu0 0.0
        %472 = vmatprep.subr.mxu0 0.0
        %473 = vmatpush1.xpose.msra.mxu0 0.0
        %474 = vmatprep.subr.mxu0 0.0
        %475 = vmatpush1.xpose.msra.mxu0 0.0
        %476 = vmatprep.subr.mxu0 0.0
        %477 = vmatpush1.xpose.msra.mxu0 0.0
        %478 = vmatprep.subr.mxu0 0.0
        %479 = vmatpush1.xpose.msra.mxu0 0.0
        %480 = vmatprep.subr.mxu0 0.0
        %481 = vmatpush1.xpose.msra.mxu0 0.0
        %482 = vmatprep.subr.mxu0 0.0
        %483 = vmatpush1.xpose.msra.mxu0 0.0
        %484 = vmatprep.subr.mxu0 0.0
        %485 = vmatpush1.xpose.msra.mxu0 0.0
        %486 = vmatprep.subr.mxu0 0.0
        %487 = vmatpush1.xpose.msra.mxu0 0.0
        %488 = vmatprep.subr.mxu0 0.0
        %489 = vmatpush1.xpose.msra.mxu0 0.0
        %490 = vmatprep.subr.mxu0 0.0
        %491 = vmatpush1.xpose.msra.mxu0 0.0
        %492 = vmatprep.mubr.f32.mxu0 0.0
        %493 = vmatmul.mubr.f32.gmra.mrb[0].mxu0 %v375
        %v494 = vpop.f32.mrb[0].mxu0
        %v495 = vadd.f32 %v366, %v494
        %v496 = vpop.f32.mrb[0].mxu0
        %497 = vmatprep.mubr.f32.mxu0 0.0
        %498 = vmatmul.mubr.f32.gmra.mrb[0].mxu0 %v378
        %v499 = vpop.f32.mrb[0].mxu0
        %v500 = vadd.f32 %v371, %v499
        %v501 = vpop.f32.mrb[0].mxu0
        %502 = vdwg.mxu0
        %v503 = vmax.f32 %v495, 0.0
        %v504 = vmax.f32 %v500, 0.0
        %v505 = vld [vmem:[%s3] sm:$0x3]
        %v506 = vld [vmem:[%s4] sm:$0x3]
        %508 = vset.pattern.permute.xlu0 0
        %509 = vperm.xlu0 %508, %v506
        %v510 = vpop.permute.xlu0 %509
        %vm512 = vcmask 130048
        %v514 = vsel %vm512, %v505, 0
        %516 = vmatprep.subr.mxu0 0.0
        %517 = vmatpush1.msra.mxu0 %v503
        %518 = vmatprep.subr.mxu0 0.0
        %519 = vmatpush1.msra.mxu0 %v504
        %520 = vmatprep.subr.mxu0 0.0
        %521 = vmatpush1.msra.mxu0 0.0
        %522 = vmatprep.subr.mxu0 0.0
        %523 = vmatpush1.msra.mxu0 0.0
        %524 = vmatprep.subr.mxu0 0.0
        %525 = vmatpush1.msra.mxu0 0.0
        %526 = vmatprep.subr.mxu0 0.0
        %527 = vmatpush1.msra.mxu0 0.0
        %528 = vmatprep.subr.mxu0 0.0
        %529 = vmatpush1.msra.mxu0 0.0
        %530 = vmatprep.subr.mxu0 0.0
        %531 = vmatpush1.msra.mxu0 0.0
        %532 = vmatprep.subr.mxu0 0.0
        %533 = vmatpush1.msra.mxu0 0.0
        %534 = vmatprep.subr.mxu0 0.0
        %535 = vmatpush1.msra.mxu0 0.0
        %536 = vmatprep.subr.mxu0 0.0
        %537 = vmatpush1.msra.mxu0 0.0
        %538 = vmatprep.subr.mxu0 0.0
        %539 = vmatpush1.msra.mxu0 0.0
        %540 = vmatprep.subr.mxu0 0.0
        %541 = vmatpush1.msra.mxu0 0.0
        %542 = vmatprep.subr.mxu0 0.0
        %543 = vmatpush1.msra.mxu0 0.0
        %544 = vmatprep.subr.mxu0 0.0
        %545 = vmatpush1.msra.mxu0 0.0
        %546 = vmatprep.subr.mxu0 0.0
        %547 = vmatpush1.msra.mxu0 0.0
        %548 = vmatprep.subr.mxu0 0.0
        %549 = vmatpush1.msra.mxu0 0.0
        %550 = vmatprep.subr.mxu0 0.0
        %551 = vmatpush1.msra.mxu0 0.0
        %552 = vmatprep.subr.mxu0 0.0
        %553 = vmatpush1.msra.mxu0 0.0
        %554 = vmatprep.subr.mxu0 0.0
        %555 = vmatpush1.msra.mxu0 0.0
        %556 = vmatprep.subr.mxu0 0.0
        %557 = vmatpush1.msra.mxu0 0.0
        %558 = vmatprep.subr.mxu0 0.0
        %559 = vmatpush1.msra.mxu0 0.0
        %560 = vmatprep.subr.mxu0 0.0
        %561 = vmatpush1.msra.mxu0 0.0
        %562 = vmatprep.subr.mxu0 0.0
        %563 = vmatpush1.msra.mxu0 0.0
        %564 = vmatprep.subr.mxu0 0.0
        %565 = vmatpush1.msra.mxu0 0.0
        %566 = vmatprep.subr.mxu0 0.0
        %567 = vmatpush1.msra.mxu0 0.0
        %568 = vmatprep.subr.mxu0 0.0
        %569 = vmatpush1.msra.mxu0 0.0
        %570 = vmatprep.subr.mxu0 0.0
        %571 = vmatpush1.msra.mxu0 0.0
        %572 = vmatprep.subr.mxu0 0.0
        %573 = vmatpush1.msra.mxu0 0.0
        %574 = vmatprep.subr.mxu0 0.0
        %575 = vmatpush1.msra.mxu0 0.0
        %576 = vmatprep.subr.mxu0 0.0
        %577 = vmatpush1.msra.mxu0 0.0
        %578 = vmatprep.subr.mxu0 0.0
        %579 = vmatpush1.msra.mxu0 0.0
        %580 = vmatprep.mubr.f32.mxu0 0.0
        %581 = vmatmul.mubr.f32.gmra.mrb[0].mxu0 %v514
        %v582 = vpop.f32.mrb[0].mxu0
        %v583 = vadd.f32 %v510, %v582
        %v584 = vpop.f32.mrb[0].mxu0
        %585 = vdwg.mxu0
        %v586 = vsub.f32 0.0, %v583
        %v587 = vmul.f32 %v586, 1.442695
        %v588 = vpow.pop %v587
        %v589 = vld [vmem:[%s342] sm:$0x1]
        %v590 = vlog2.pop %v589
        %v591 = vmul.f32 %v590, 0.6931472
        %v592 = vld [vmem:[%s339] sm:$0x1]
        %v594 = vrot.slane %v586, 7
        %v596 = vadd.f32 %v586, %v594
        %v597 = vsub.f32 %v588, 1.0
        %v598 = vmul.f32 %v597, %v591
        %v600 = vrot.slane %v598, 7
        %v602 = vadd.f32 %v596, %v600
        %v605 = vunpack.c.l.s4 1966171168
        %v606 = vunpack.c.0.s8 %v605
        %v607 = vlaneseq
        %v608 = vshrl.u32 %v607, 7
        %v609 = vsub.s32 %v606, %v608
        %v610 = vrot.slane %v602, %v609
        %v611 = vcombine.high %v610, %v610
        %v613 = vunpack.c.l.s4 1966171168
        %v614 = vunpack.c.0.s8 %v613
        %v615 = vlaneseq
        %v616 = vshrl.u32 %v615, 7
        %v617 = vsub.s32 %v614, %v616
        %v618 = vrot.slane %v611, %v617
        %v620 = vmul.f32 %v592, %v618
        %621 = vst [vmem:[%s324] sm:$0x1] %v620
        %v622 = vmul.f32 %v588, %v591
        %v624 = vrot.slane %v622, 7
        %v626 = vadd.f32 %v586, %v624
        %v627 = vmul.f32 %v626, 1.442695
        %v628 = vpow.pop %v627
        %v629 = vsub.f32 0.0, %v628
        %630 = vst [vmem:[%s330 - $0x1] sm:$0x2] %v629
        %s631 = sand.u32 %s196, 1
        %s632 = scalar_lea.sflag [#allocation3], %s631
        %s633 = sand.u32 %s196, 1
        %s634 = scalar_lea.vmem [#allocation2], %s633
        %s635 = sand.u32 %s222, 1
        %s636 = scalar_lea.sflag [#allocation5], %s635
        %s637 = sand.u32 %s222, 1
        %s638 = scalar_lea.vmem [#allocation4], %s637
        // Predicated region
        $region49: #{weibull_nn_forward.1} parent=47 // pred_check
          %p639 = pneg %p206
        $region50: #{weibull_nn_forward.1} parent=47 // pred_check_branch
          %641 = sbr.rel (%p639) target = $region52
        $region51: #{weibull_nn_forward.1} parent=47 // pred_region
          %s643 = ssub.s32 16, 16
          %644 = vsyncadd %s632, %s643
          %s645 = smul.addr %s26, 16
          %s646 = scalar_lea.hbm %s7, %s645
          %s648 = sshll.u32 %s634, 4
          %s649 = int_to_ptr.vmem [resolvable:$true] %s648
          %651 = dma.vmem_to_hbm [thread:$0]  %s649, 16, %s646, %s632
        $region52: #{weibull_nn_forward.1} parent=47 // pred_fallthru
          _
        // Predicated region
        $region53: #{weibull_nn_forward.1} parent=47 // pred_check
          %p652 = pneg %p232
        $region54: #{weibull_nn_forward.1} parent=47 // pred_check_branch
          %654 = sbr.rel (%p652) target = $region56
        $region55: #{weibull_nn_forward.1} parent=47 // pred_region
          %s656 = ssub.s32 16, 16
          %657 = vsyncadd %s636, %s656
          %s658 = smul.addr %s26, 16
          %s659 = scalar_lea.hbm %s8, %s658
          %s661 = sshll.u32 %s638, 4
          %s662 = int_to_ptr.vmem [resolvable:$true] %s661
          %664 = dma.vmem_to_hbm [thread:$0]  %s662, 16, %s659, %s636
        $region56: #{weibull_nn_forward.1} parent=47 // pred_fallthru
          _
      $region48: #{weibull_nn_forward.1} parent=5 // pred_fallthru
        _
      %p665 = scmp.le.s32.totalorder 2, %s21
      // Predicated region
      $region57: #{weibull_nn_forward.1} parent=5 // pred_check
        %p666 = pneg %p665
      $region58: #{weibull_nn_forward.1} parent=5 // pred_check_branch
        %668 = sbr.rel (%p666) target = $region60
      $region59: #{weibull_nn_forward.1} parent=5 // pred_region
        %s669 = ssub.s32 %s21, 2
        // Predicated region
        $region61: #{weibull_nn_forward.1} parent=59 // pred_check
          %p670 = pneg %p212
        $region62: #{weibull_nn_forward.1} parent=59 // pred_check_branch
          %672 = sbr.rel (%p670) target = $region64
        $region63: #{weibull_nn_forward.1} parent=59 // pred_region
          %s673 = sand.u32 %s197, 1
          %s674 = scalar_lea.sflag [#allocation3], %s673
          %s675 = sand.u32 %s197, 1
          %s676 = scalar_lea.vmem [#allocation2], %s675
          %677 = dma.done %s674, 16
        $region64: #{weibull_nn_forward.1} parent=59 // pred_fallthru
          _
        // Predicated region
        $region65: #{weibull_nn_forward.1} parent=59 // pred_check
          %p678 = pneg %p238
        $region66: #{weibull_nn_forward.1} parent=59 // pred_check_branch
          %680 = sbr.rel (%p678) target = $region68
        $region67: #{weibull_nn_forward.1} parent=59 // pred_region
          %s681 = sand.u32 %s223, 1
          %s682 = scalar_lea.sflag [#allocation5], %s681
          %s683 = sand.u32 %s223, 1
          %s684 = scalar_lea.vmem [#allocation4], %s683
          %685 = dma.done %s682, 16
        $region68: #{weibull_nn_forward.1} parent=59 // pred_fallthru
          _
      $region60: #{weibull_nn_forward.1} parent=5 // pred_fallthru
        _
    $region6: #{weibull_nn_forward.1} parent=1 // loop_footer
      %s25 = sadd.s32 1, %s21
    $region7: #{weibull_nn_forward.1} parent=1 // loop_footer_branch
      %20 = sbr.rel target = $region3
    $region8: #{weibull_nn_forward.1} parent=1 // loop_exit
      _
    %686 = vsyncpa [#allocation3], 1
    %s687 = scalar_lea.sflag [#allocation3], 1
    %688 = vsyncpa %s687, 1
    %689 = vsyncpa [#allocation5], 1
    %s690 = scalar_lea.sflag [#allocation5], 1
    %691 = vsyncpa %s690, 1

</llo_original>
